<compile_context>
chip_gen: v7x
topology: tpu7x:2x2x1
jax: 0.10.0
libtpu: 0.0.40
codegen_flags: <defaults>
</compile_context>

<pallas_src>
import functools
import math

import jax
import jax.numpy as jnp
from jax.experimental import pallas as pl
from jax.experimental.pallas import tpu as pltpu


def _round_up(x, m):
    return ((x + m - 1) // m) * m


def _decaying_rescaled_relu_kernel(scale_ref, x_ref, o_ref, *, eps):
    # scale_ref: SMEM (1,) f32 scalar = current decay scale.
    # x_ref/o_ref: (tb, H) tiles; H is the full feature dim (no padding, no mask).
    x = x_ref[...].astype(jnp.float32)
    jumped = jnp.maximum(x, 0.0) + jnp.float32(eps)           # relu(x) + eps, f32
    denom = jnp.sum(jumped, axis=1, keepdims=True)            # row sum (XLU slot)
    inv = pl.reciprocal(denom, approx=True)                   # EUP slot (~free)
    inv = inv * (jnp.float32(2.0) - denom * inv)              # 1 Newton step, (tb,1) only
    o_ref[...] = (jumped * (inv * scale_ref[0])).astype(o_ref.dtype)


def _vmem_capacity_bytes():
    """Per-core VMEM capacity; conservative fallback if the query is unavailable."""
    try:
        cap = int(pltpu.get_tpu_info().vmem_capacity_bytes)
        if cap > 0:
            return min(cap, 128 << 20)
    except Exception:  # pragma: no cover - robustness on unusual runtimes
        pass
    return 64 << 20  # v7x per-TC size: safe lower bound across generations


def decaying_rescaled_relu(x, scale, *, eps=1e-10):
    """x: (B, H) float. scale: scalar decay factor (host float or 0-d array)."""
    B, H = x.shape
    dtype = x.dtype
    itemsize = jnp.dtype(dtype).itemsize

    # ---- Row-tile sizing (bandwidth-bound streaming kernel) -------------------
    # Keep 2 buffers x (in + out) x tb x H under ~half of per-core VMEM, target a
    # few MiB per buffer, and guarantee >=4 grid steps when the batch allows so
    # the pipeline (and both v7x TensorCores) stay busy.
    vmem_cap = _vmem_capacity_bytes()
    buffers_budget = vmem_cap // 2                     # all double buffers
    per_buffer_target = 8 << 20                        # ~8 MiB per buffer
    row_bytes = H * itemsize
    rows_by_budget = max(1, buffers_budget // (4 * row_bytes))
    rows_by_buffer = max(1, per_buffer_target // row_bytes)
    rows_for_steps = _round_up(pl.cdiv(B, 4), 8)       # >=4 grid steps if B large
    tb = min(rows_by_budget, rows_by_buffer, rows_for_steps)
    tb = max(8, (tb // 8) * 8)                         # sublane-aligned
    if tb >= B:
        tb = B                                         # single full-batch block (legal for any B)

    grid = (pl.cdiv(B, tb),)

    # Scoped-VMEM limit: buffers + f32 intermediates, with headroom.
    block_bytes_io = tb * H * itemsize
    block_bytes_f32 = tb * H * 4
    vmem_limit = int(min(vmem_cap,
                         max(32 << 20, 4 * block_bytes_io + 4 * block_bytes_f32)))

    cost = pl.CostEstimate(
        flops=4 * B * H,
        transcendentals=B,
        bytes_accessed=2 * B * H * itemsize,
    )

    scale_arr = jnp.asarray(scale, dtype=jnp.float32).reshape((1,))
    kernel = functools.partial(_decaying_rescaled_relu_kernel, eps=eps)

    return pl.pallas_call(
        kernel,
        out_shape=jax.ShapeDtypeStruct((B, H), dtype),
        grid=grid,
        in_specs=[
            pl.BlockSpec(memory_space=pltpu.MemorySpace.SMEM),   # scale scalar
            pl.BlockSpec((tb, H), lambda i: (i, 0)),             # x row-tile
        ],
        out_specs=pl.BlockSpec((tb, H), lambda i: (i, 0)),
        compiler_params=pltpu.CompilerParams(
            dimension_semantics=("parallel",),
            vmem_limit_bytes=vmem_limit,
        ),
        cost_estimate=cost,
    )(scale_arr, x)


def get_decay_factor(current_epoch, decay_epochs=10, decay_schedule="exponential",
                     decay_rate=0.4, initial_value=100.0, final_value=1.0):
    """Host-side mirror of EpochAwareMixin.get_decay_factor (pure Python)."""
    if current_epoch >= decay_epochs:
        return float(final_value)
    progress = min(1.0, max(0.0, current_epoch / decay_epochs))
    if decay_schedule == "linear":
        return initial_value * (1 - progress) + final_value * progress
    elif decay_schedule == "exponential":
        decay = decay_rate ** current_epoch
        norm = (decay - decay_rate ** decay_epochs) / (1 - decay_rate ** decay_epochs)
        return initial_value * norm + final_value * (1 - norm)
    elif decay_schedule == "cosine":
        return final_value + 0.5 * (initial_value - final_value) * (1 + math.cos(math.pi * progress))
    return initial_value * (1 - progress) + final_value * progress


def _reference(x, scale, eps=1e-10):
    r = jnp.maximum(x, 0.0) + eps
    return r / jnp.sum(r, axis=1, keepdims=True) * scale


if __name__ == "__main__":
    key = jax.random.PRNGKey(0)

    # DecayingRescaledReLU(initial_scale=100, final_scale=1, decay_epochs=10,
    #                      decay_schedule='exponential', decay_rate=0.4) at epoch 3.
    # TODO(synk): epoch bookkeeping / forward_count / random debug printing stay host-side.
    current_epoch = 3
    scale = get_decay_factor(current_epoch, decay_epochs=10,
                             decay_schedule="exponential", decay_rate=0.4,
                             initial_value=100.0, final_value=1.0)

    # Case 1: aligned hidden dim (batch=8, hidden=32).
    k1, k2 = jax.random.split(key)
    x1 = jax.random.normal(k1, (8, 32), dtype=jnp.float32)
    out1 = jax.block_until_ready(decaying_rescaled_relu(x1, scale))
    ref1 = _reference(x1, jnp.float32(scale))
    assert out1.shape == x1.shape
    assert jnp.allclose(out1, ref1, atol=1e-5, rtol=1e-5), "mismatch vs reference (aligned)"

    # Case 2: unaligned hidden dim + partial batch block (batch=10, hidden=50)
    # exercises the no-pad full-dim block path and masked tail stores.
    x2 = jax.random.normal(k2, (10, 50), dtype=jnp.float32)
    out2 = jax.block_until_ready(decaying_rescaled_relu(x2, scale))
    ref2 = _reference(x2, jnp.float32(scale))
    assert out2.shape == x2.shape
    assert jnp.allclose(out2, ref2, atol=1e-5, rtol=1e-5), "mismatch vs reference (unaligned)"

    print("KERNEL_OK")
</pallas_src>

<mosaic_0001>
module attributes {stable_mosaic.version = 11 : i64} {
  func.func @_decaying_rescaled_relu_kernel(%arg0: i32, %arg1: memref<1xf32, #tpu.memory_space<smem>>, %arg2: memref<8x32xf32, #tpu.memory_space<vmem>>, %arg3: memref<8x32xf32, #tpu.memory_space<vmem>>) attributes {dimension_semantics = [#tpu.dimension_semantics<parallel>], iteration_bounds = array<i64: 1>, scalar_prefetch = 0 : i64, scratch_operands = 0 : i64, tpu.core_type = #tpu.core_type<tc>, window_params = [{transform_indices = @transform_0, window_bounds = array<i64: 1>}, {transform_indices = @transform_1, window_bounds = array<i64: 8, 32>}, {transform_indices = @transform_2, window_bounds = array<i64: 8, 32>}]} {
    %c0 = arith.constant 0 : index
    %c0_0 = arith.constant 0 : index
    %0 = vector.load %arg2[%c0, %c0_0] : memref<8x32xf32, #tpu.memory_space<vmem>>, vector<8x32xf32>
    %cst = arith.constant 0.000000e+00 : f32
    %1 = vector.broadcast %cst : f32 to vector<8x32xf32>
    %2 = arith.maximumf %0, %1 : vector<8x32xf32>
    %cst_1 = arith.constant 1.000000e-10 : f32
    %3 = vector.broadcast %cst_1 : f32 to vector<8x32xf32>
    %4 = arith.addf %2, %3 : vector<8x32xf32>
    %cst_2 = arith.constant dense<0.000000e+00> : vector<8xf32>
    %5 = vector.multi_reduction <add>, %4, %cst_2 [1] : vector<8x32xf32> to vector<8xf32>
    %6 = vector.shape_cast %5 : vector<8xf32> to vector<8x1xf32>
    %7 = tpu.reciprocal %6 {approx = true} : vector<8x1xf32> -> vector<8x1xf32>
    %8 = arith.mulf %6, %7 : vector<8x1xf32>
    %cst_3 = arith.constant 2.000000e+00 : f32
    %9 = vector.broadcast %cst_3 : f32 to vector<8x1xf32>
    %10 = arith.subf %9, %8 : vector<8x1xf32>
    %11 = arith.mulf %7, %10 : vector<8x1xf32>
    %c0_4 = arith.constant 0 : index
    %12 = memref.load %arg1[%c0_4] : memref<1xf32, #tpu.memory_space<smem>>
    %13 = vector.broadcast %12 : f32 to vector<8x1xf32>
    %14 = arith.mulf %11, %13 : vector<8x1xf32>
    %15 = vector.broadcast %14 : vector<8x1xf32> to vector<8x32xf32>
    %16 = arith.mulf %4, %15 : vector<8x32xf32>
    %c0_5 = arith.constant 0 : index
    %c0_6 = arith.constant 0 : index
    %17 = vector.load %arg3[%c0_5, %c0_6] : memref<8x32xf32, #tpu.memory_space<vmem>>, vector<8x32xf32>
    tpu.vector_store %arg3[%c0_5, %c0_6], %16 {strides = array<i32>} : memref<8x32xf32, #tpu.memory_space<vmem>>, vector<8x32xf32>,
    return
  }
  func.func @transform_0(%arg0: i32) -> i32 {
    %c0_i32 = arith.constant 0 : i32
    %c0_i32_0 = arith.constant 0 : i32
    return %c0_i32 : i32
  }
  func.func @transform_1(%arg0: i32) -> (i32, i32) {
    %c0_i32 = arith.constant 0 : i32
    %c0_i32_0 = arith.constant 0 : i32
    return %arg0, %c0_i32 : i32, i32
  }
  func.func @transform_2(%arg0: i32) -> (i32, i32) {
    %c0_i32 = arith.constant 0 : i32
    %c0_i32_0 = arith.constant 0 : i32
    return %arg0, %c0_i32 : i32, i32
  }
}

</mosaic_0001>

<llo_original>
// kernel: tpu_custom_call.1
$region0: #{tpu_custom_call.1}
  #allocation0 [shape = 'u32[]', space=smem, size = 0x4, offset = 0x4, fixed_abs, tag = 'smem constant byte address 0x4 - core index']
  #allocation1 [shape = 'u32[144,128]{1,0:T(1,128)}', space=vmem, size = 0x12000, scoped, tag = 'internal scratch']
  #allocation2 [shape = 'f32[1]{0:T(128)S(6)}', space=smem, size = 0x200, scoped, tag = 'scoped memory for tpu_custom_call.1']
  %s0 = inlined_call_operand.<no memory space> [shape: f32[1], index: 0, kind: input, shape index: {}]
  %s1 = inlined_call_operand.hbm [shape: f32[8,32], index: 1, kind: input, shape index: {}]
  %s2 = inlined_call_operand.hbm [shape: f32[8,32], index: 2, kind: output, shape index: {}]
  %s3 = sld [smem:[#allocation0]]
  $region22: #{tpu_custom_call.1} parent=0
    _
  %s5 = ssub.s32 1, %s3
  %s6 = scalar_select 0, %s5, %s3
  %7 = sst [smem:[#allocation2]] %s0
  $region1: #{tpu_custom_call.1} parent=0
    #allocation3 [shape = 'u8[4096]{0}', space=vmem, size = 0x1000, scoped, tag = 'input window, operand 1, single buffered']
    #allocation4 [shape = 's32[1]{0}', space=sflag, size = 0x4, scoped, tag = 'scoped memory for tpu_custom_call.1']
    #allocation5 [shape = 's32[1]{0}', space=sflag, size = 0x4, scoped, tag = 'scoped memory for tpu_custom_call.1']
    #allocation6 [shape = 'u8[4096]{0}', space=vmem, size = 0x1000, scoped, tag = 'output window, operand 0, single buffered']
    %8 = vsyncpa [#allocation4], 0
    %9 = vsyncpa [#allocation5], 0
    // Predicated region
    $region2: #{tpu_custom_call.1} parent=1 // pred_check
      _
    $region3: #{tpu_custom_call.1} parent=1 // pred_check_branch
      %11 = sbr.rel (0) target = $region5
    $region4: #{tpu_custom_call.1} parent=1 // pred_region
      _
    $region5: #{tpu_custom_call.1} parent=1 // pred_fallthru
      _
    // Predicated region
    $region6: #{tpu_custom_call.1} parent=1 // pred_check
      _
    $region7: #{tpu_custom_call.1} parent=1 // pred_check_branch
      %13 = sbr.rel (0) target = $region9
    $region8: #{tpu_custom_call.1} parent=1 // pred_region
      %s15 = ssub.s32 128, 128
      %16 = vsyncadd [#allocation4], %s15
      %s18 = sshll.u32 [#allocation3], 4
      %s19 = int_to_ptr.vmem [resolvable:$true] %s18
      %21 = dma.hbm_to_vmem [thread:$0]  %s1, 128, %s19, [#allocation4]
    $region9: #{tpu_custom_call.1} parent=1 // pred_fallthru
      _
    // Predicated region
    $region10: #{tpu_custom_call.1} parent=1 // pred_check
      _
    $region11: #{tpu_custom_call.1} parent=1 // pred_check_branch
      %23 = sbr.rel (0) target = $region13
    $region12: #{tpu_custom_call.1} parent=1 // pred_region
      %24 = dma.done [#allocation4], 128
    $region13: #{tpu_custom_call.1} parent=1 // pred_fallthru
      _
    %v25 = vld [vmem:[#allocation3] sm:$0xff]
    %v26 = vmax.f32 %v25, 0.0
    %v27 = vadd.f32 %v26, 1e-10
    %vm28 = vcmask 261120
    %v29 = vsel %vm28, %v27, 0.0
    %30 = vadd.xlane.f32.xlu0 %v29
    %v31 = vpop.xlane.xlu0 %30
    %v32 = vrcp.pop %v31
    %v33 = vmul.f32 %v31, %v32
    %v34 = vsub.f32 2.0, %v33
    %v35 = vmul.f32 %v32, %v34
    %s36 = sld [smem:[#allocation2]]
    %v37 = vstv %s36
    %v38 = vmul.f32 %v35, %v37
    %v39 = vmul.f32 %v27, %v38
    %40 = vst.msk [vmem:[#allocation6] sm:$0xff] %vm28, %v39
    // Predicated region
    $region14: #{tpu_custom_call.1} parent=1 // pred_check
      _
    $region15: #{tpu_custom_call.1} parent=1 // pred_check_branch
      %42 = sbr.rel (0) target = $region17
    $region16: #{tpu_custom_call.1} parent=1 // pred_region
      %s44 = ssub.s32 128, 128
      %45 = vsyncadd [#allocation5], %s44
      %s47 = sshll.u32 [#allocation6], 4
      %s48 = int_to_ptr.vmem [resolvable:$true] %s47
      %50 = dma.vmem_to_hbm [thread:$0]  %s48, 128, %s2, [#allocation5]
    $region17: #{tpu_custom_call.1} parent=1 // pred_fallthru
      _
    // Predicated region
    $region18: #{tpu_custom_call.1} parent=1 // pred_check
      _
    $region19: #{tpu_custom_call.1} parent=1 // pred_check_branch
      %52 = sbr.rel (0) target = $region21
    $region20: #{tpu_custom_call.1} parent=1 // pred_region
      %53 = dma.done [#allocation5], 128
    $region21: #{tpu_custom_call.1} parent=1 // pred_fallthru
      _
    %54 = vsyncpa [#allocation4], 1
    %55 = vsyncpa [#allocation5], 1

</llo_original>
